<compile_context>
chip_gen: v6e
topology: v6e:2x2x1
jax: 0.10.0
libtpu: 0.0.40
codegen_flags: <defaults>
</compile_context>

<pallas_src>
import functools

import jax
import jax.numpy as jnp
from jax.experimental import pallas as pl
from jax.experimental.pallas import tpu as pltpu


def _round_up(x, m):
    return (x + m - 1) // m * m


def _fused_mlp_kernel(*refs, num_layers, compute_dtype):
    """refs = (x_ref, w0, b0, w1, b1, ..., w_{L-1}, b_{L-1}, o_ref).

    One row-tile of x flows through all layers entirely in VMEM/vregs.
    """
    x_ref = refs[0]
    o_ref = refs[-1]

    h = x_ref[...].astype(compute_dtype)               # (TM, K) -> bf16 for the MXU
    for li in range(num_layers):
        w_ref = refs[1 + 2 * li]                       # (Kin, Kout) bf16, resident
        b_ref = refs[2 + 2 * li]                       # (1, Kout) f32, resident
        acc = jnp.dot(h, w_ref[...], preferred_element_type=jnp.float32)
        acc = acc + b_ref[...]                         # f32 bias add (row broadcast)
        if li < num_layers - 1:
            # relu in f32 on the accumulator; dropout is identity in eval mode.
            h = jnp.maximum(acc, 0.0).astype(compute_dtype)
        else:
            o_ref[...] = acc.astype(o_ref.dtype)


def mlp_forward_pallas(x, params, *, tile_m=512, compute_dtype=jnp.bfloat16,
                       out_dtype=None):
    """x: [M, in_channels]; params: list of (W [in, out], b [1, out])."""
    num_layers = len(params)
    M, K = x.shape
    out_channels = params[-1][0].shape[1]
    out_dtype = x.dtype if out_dtype is None else out_dtype

    # Row tiling: aim for >= 4 row tiles (>= 2 per TensorCore on v7x) while keeping
    # TM a multiple of 8 (sublane).  Partial trailing tiles are masked by Pallas.
    TM = min(tile_m, max(8, _round_up(pl.cdiv(M, 4), 8)))
    grid = (pl.cdiv(M, TM),)

    # Weights -> bf16 once on the host (tiny, one-time); x stays unpadded f32 in HBM.
    w_list = [w.astype(compute_dtype) for (w, _) in params]
    b_list = [b.astype(jnp.float32) for (_, b) in params]
    flat_inputs = [x]
    for w, b in zip(w_list, b_list):
        flat_inputs += [w, b]

    out_shape = jax.ShapeDtypeStruct((M, out_channels), out_dtype)

    # --- VMEM budget / cost model from actual buffer sizes. ---
    x_bufs, w_bufs = 3, 1                                     # requested pipeline depths
    weight_bytes = sum(w.size * w.dtype.itemsize for w in w_list)
    bias_bytes = sum(b.size * b.dtype.itemsize for b in b_list)
    max_hidden = max(w.shape[1] for w in w_list)
    vmem_need = (x_bufs * TM * K * x.dtype.itemsize
                 + w_bufs * (weight_bytes + bias_bytes)
                 + 2 * TM * out_channels * jnp.dtype(out_dtype).itemsize
                 + 2 * TM * max_hidden * 4)                   # f32 intermediates/accum
    # 1.5x headroom + 4 MiB Mosaic scratch; keep below v7x's 64 MiB physical VMEM.
    vmem_limit = min(max(int(1.5 * vmem_need) + (4 << 20), 16 << 20), 60 << 20)

    dims = [K] + [w.shape[1] for w in w_list]
    flops = 2 * M * sum(dims[i] * dims[i + 1] for i in range(num_layers))
    bytes_accessed = (x.size * x.dtype.itemsize + weight_bytes + bias_bytes
                      + M * out_channels * jnp.dtype(out_dtype).itemsize)

    kernel = functools.partial(_fused_mlp_kernel, num_layers=num_layers,
                               compute_dtype=compute_dtype)

    def build_call(custom_buffering):
        def x_spec():
            if custom_buffering:
                return pl.BlockSpec((TM, K), lambda i: (i, 0),
                                    pipeline_mode=pl.Buffered(3))
            return pl.BlockSpec((TM, K), lambda i: (i, 0))

        def const_spec(shape):
            # Constant index_map -> fetched once, stays resident across row tiles.
            if custom_buffering:
                return pl.BlockSpec(shape, lambda i: (0, 0),
                                    pipeline_mode=pl.Buffered(1))
            return pl.BlockSpec(shape, lambda i: (0, 0))

        in_specs = [x_spec()]
        for w, b in zip(w_list, b_list):
            in_specs.append(const_spec(w.shape))
            in_specs.append(const_spec(b.shape))

        return pl.pallas_call(
            kernel,
            out_shape=out_shape,
            grid=grid,
            in_specs=in_specs,
            out_specs=pl.BlockSpec((TM, out_channels), lambda i: (i, 0)),
            compiler_params=pltpu.CompilerParams(
                dimension_semantics=("parallel",),     # shard row tiles across TCs
                vmem_limit_bytes=vmem_limit),
            cost_estimate=pl.CostEstimate(
                flops=flops, transcendentals=0, bytes_accessed=bytes_accessed),
        )

    try:
        return build_call(custom_buffering=True)(*flat_inputs)
    except Exception:
        # Older Pallas versions may reject pipeline_mode on pallas_call BlockSpecs;
        # fall back to default double-buffering (identical semantics, more VMEM).
        return build_call(custom_buffering=False)(*flat_inputs)


def init_mlp_params(key, in_channels, hidden_channels, out_channels, num_layers,
                    dtype=jnp.float32):
    """Parameter init matching nn.Linear's U(-1/sqrt(fan_in), 1/sqrt(fan_in));
    W stored already transposed to [in, out]."""
    dims = [in_channels] + [hidden_channels] * (num_layers - 1) + [out_channels]
    params = []
    for li in range(num_layers):
        key, kw, kb = jax.random.split(key, 3)
        fan_in, fan_out = dims[li], dims[li + 1]
        bound = 1.0 / float(fan_in) ** 0.5
        w = jax.random.uniform(kw, (fan_in, fan_out), dtype, -bound, bound)
        b = jax.random.uniform(kb, (1, fan_out), dtype, -bound, bound)
        params.append((w, b))
    return params


def mlp_reference_f32(x, params):
    """Pure f32 reference of the PyTorch forward (eval mode)."""
    for (w, b) in params[:-1]:
        x = jnp.maximum(x @ w + b, 0.0)
    w, b = params[-1]
    return x @ w + b


def mlp_reference_bf16(x, params):
    """Reference matching the kernel's bf16-compute / f32-accumulate arithmetic."""
    h = x.astype(jnp.bfloat16)
    out = None
    for i, (w, b) in enumerate(params):
        acc = jnp.dot(h, w.astype(jnp.bfloat16),
                      preferred_element_type=jnp.float32) + b.astype(jnp.float32)
        if i < len(params) - 1:
            h = jnp.maximum(acc, 0.0).astype(jnp.bfloat16)
        else:
            out = acc
    return out


if __name__ == "__main__":
    in_channels, hidden_channels, out_channels = 32, 64, 16
    num_layers = 3
    n_nodes = 16
    dropout_p = 0.5  # identity in eval mode

    key = jax.random.PRNGKey(0)
    key, kx = jax.random.split(key)
    x = jax.random.normal(kx, (n_nodes, in_channels), jnp.float32)

    params = init_mlp_params(key, in_channels, hidden_channels, out_channels,
                             num_layers)

    out = mlp_forward_pallas(x, params)
    out = jax.block_until_ready(out)
    assert out.shape == (n_nodes, out_channels)
    assert out.dtype == jnp.float32

    # Tight check vs a reference doing the same bf16-in / f32-accumulate math.
    ref_bf16 = mlp_reference_bf16(x, params)
    assert jnp.allclose(out, ref_bf16, atol=1e-2, rtol=1e-2), \
        "mismatch vs bf16-matched reference"

    # Loose sanity check vs the pure-f32 PyTorch-equivalent forward.
    ref_f32 = mlp_reference_f32(x, params)
    assert jnp.allclose(out, ref_f32, atol=1e-1, rtol=1e-1), \
        "mismatch vs f32 reference"

    print("KERNEL_OK")
</pallas_src>

<mosaic_0001>
module attributes {stable_mosaic.version = 11 : i64} {
  func.func @_fused_mlp_kernel(%arg0: i32, %arg1: memref<8x32xf32, #tpu.memory_space<vmem>>, %arg2: memref<32x64xbf16, #tpu.memory_space<vmem>>, %arg3: memref<1x64xf32, #tpu.memory_space<vmem>>, %arg4: memref<64x64xbf16, #tpu.memory_space<vmem>>, %arg5: memref<1x64xf32, #tpu.memory_space<vmem>>, %arg6: memref<64x16xbf16, #tpu.memory_space<vmem>>, %arg7: memref<1x16xf32, #tpu.memory_space<vmem>>, %arg8: memref<8x16xf32, #tpu.memory_space<vmem>>) attributes {dimension_semantics = [#tpu.dimension_semantics<parallel>], iteration_bounds = array<i64: 2>, scalar_prefetch = 0 : i64, scratch_operands = 0 : i64, tpu.core_type = #tpu.core_type<tc>, window_params = [{transform_indices = @transform_0, window_bounds = array<i64: 8, 32>}, {pipeline_mode = #tpu.pipeline_mode<synchronous>, transform_indices = @transform_1, window_bounds = array<i64: 32, 64>}, {pipeline_mode = #tpu.pipeline_mode<synchronous>, transform_indices = @transform_2, window_bounds = array<i64: 1, 64>}, {pipeline_mode = #tpu.pipeline_mode<synchronous>, transform_indices = @transform_3, window_bounds = array<i64: 64, 64>}, {pipeline_mode = #tpu.pipeline_mode<synchronous>, transform_indices = @transform_4, window_bounds = array<i64: 1, 64>}, {pipeline_mode = #tpu.pipeline_mode<synchronous>, transform_indices = @transform_5, window_bounds = array<i64: 64, 16>}, {pipeline_mode = #tpu.pipeline_mode<synchronous>, transform_indices = @transform_6, window_bounds = array<i64: 1, 16>}, {transform_indices = @transform_7, window_bounds = array<i64: 8, 16>}]} {
    %c0 = arith.constant 0 : index
    %c0_0 = arith.constant 0 : index
    %0 = vector.load %arg1[%c0, %c0_0] : memref<8x32xf32, #tpu.memory_space<vmem>>, vector<8x32xf32>
    %1 = arith.truncf %0 : vector<8x32xf32> to vector<8x32xbf16>
    %c0_1 = arith.constant 0 : index
    %c0_2 = arith.constant 0 : index
    %2 = vector.load %arg2[%c0_1, %c0_2] : memref<32x64xbf16, #tpu.memory_space<vmem>>, vector<32x64xbf16>
    %cst = arith.constant dense<0.000000e+00> : vector<8x64xf32>
    %3 = tpu.matmul %1, %2, %cst {dimension_numbers = #tpu.dot_dimension_numbers<[1], [0], [0], [1], [0, 0, 1, 1], [], []>} : vector<8x32xbf16>, vector<32x64xbf16>, vector<8x64xf32> -> vector<8x64xf32>
    %c0_3 = arith.constant 0 : index
    %c0_4 = arith.constant 0 : index
    %4 = vector.load %arg3[%c0_3, %c0_4] : memref<1x64xf32, #tpu.memory_space<vmem>>, vector<1x64xf32>
    %5 = vector.broadcast %4 : vector<1x64xf32> to vector<8x64xf32>
    %6 = arith.addf %3, %5 : vector<8x64xf32>
    %cst_5 = arith.constant 0.000000e+00 : f32
    %7 = vector.broadcast %cst_5 : f32 to vector<8x64xf32>
    %8 = arith.maximumf %6, %7 : vector<8x64xf32>
    %9 = arith.truncf %8 : vector<8x64xf32> to vector<8x64xbf16>
    %c0_6 = arith.constant 0 : index
    %c0_7 = arith.constant 0 : index
    %10 = vector.load %arg4[%c0_6, %c0_7] : memref<64x64xbf16, #tpu.memory_space<vmem>>, vector<64x64xbf16>
    %cst_8 = arith.constant dense<0.000000e+00> : vector<8x64xf32>
    %11 = tpu.matmul %9, %10, %cst_8 {dimension_numbers = #tpu.dot_dimension_numbers<[1], [0], [0], [1], [0, 0, 1, 1], [], []>} : vector<8x64xbf16>, vector<64x64xbf16>, vector<8x64xf32> -> vector<8x64xf32>
    %c0_9 = arith.constant 0 : index
    %c0_10 = arith.constant 0 : index
    %12 = vector.load %arg5[%c0_9, %c0_10] : memref<1x64xf32, #tpu.memory_space<vmem>>, vector<1x64xf32>
    %13 = vector.broadcast %12 : vector<1x64xf32> to vector<8x64xf32>
    %14 = arith.addf %11, %13 : vector<8x64xf32>
    %cst_11 = arith.constant 0.000000e+00 : f32
    %15 = vector.broadcast %cst_11 : f32 to vector<8x64xf32>
    %16 = arith.maximumf %14, %15 : vector<8x64xf32>
    %17 = arith.truncf %16 : vector<8x64xf32> to vector<8x64xbf16>
    %c0_12 = arith.constant 0 : index
    %c0_13 = arith.constant 0 : index
    %18 = vector.load %arg6[%c0_12, %c0_13] : memref<64x16xbf16, #tpu.memory_space<vmem>>, vector<64x16xbf16>
    %cst_14 = arith.constant dense<0.000000e+00> : vector<8x16xf32>
    %19 = tpu.matmul %17, %18, %cst_14 {dimension_numbers = #tpu.dot_dimension_numbers<[1], [0], [0], [1], [0, 0, 1, 1], [], []>} : vector<8x64xbf16>, vector<64x16xbf16>, vector<8x16xf32> -> vector<8x16xf32>
    %c0_15 = arith.constant 0 : index
    %c0_16 = arith.constant 0 : index
    %20 = vector.load %arg7[%c0_15, %c0_16] : memref<1x16xf32, #tpu.memory_space<vmem>>, vector<1x16xf32>
    %21 = vector.broadcast %20 : vector<1x16xf32> to vector<8x16xf32>
    %22 = arith.addf %19, %21 : vector<8x16xf32>
    %c0_17 = arith.constant 0 : index
    %c0_18 = arith.constant 0 : index
    %23 = vector.load %arg8[%c0_17, %c0_18] : memref<8x16xf32, #tpu.memory_space<vmem>>, vector<8x16xf32>
    tpu.vector_store %arg8[%c0_17, %c0_18], %22 {strides = array<i32>} : memref<8x16xf32, #tpu.memory_space<vmem>>, vector<8x16xf32>,
    return
  }
  func.func @transform_0(%arg0: i32) -> (i32, i32) {
    %c0_i32 = arith.constant 0 : i32
    %c0_i32_0 = arith.constant 0 : i32
    return %arg0, %c0_i32 : i32, i32
  }
  func.func @transform_1(%arg0: i32) -> (i32, i32) {
    %c0_i32 = arith.constant 0 : i32
    %c0_i32_0 = arith.constant 0 : i32
    %c0_i32_1 = arith.constant 0 : i32
    return %c0_i32, %c0_i32_0 : i32, i32
  }
  func.func @transform_2(%arg0: i32) -> (i32, i32) {
    %c0_i32 = arith.constant 0 : i32
    %c0_i32_0 = arith.constant 0 : i32
    %c0_i32_1 = arith.constant 0 : i32
    return %c0_i32, %c0_i32_0 : i32, i32
  }
  func.func @transform_3(%arg0: i32) -> (i32, i32) {
    %c0_i32 = arith.constant 0 : i32
    %c0_i32_0 = arith.constant 0 : i32
    %c0_i32_1 = arith.constant 0 : i32
    return %c0_i32, %c0_i32_0 : i32, i32
  }
  func.func @transform_4(%arg0: i32) -> (i32, i32) {
    %c0_i32 = arith.constant 0 : i32
    %c0_i32_0 = arith.constant 0 : i32
    %c0_i32_1 = arith.constant 0 : i32
    return %c0_i32, %c0_i32_0 : i32, i32
  }
  func.func @transform_5(%arg0: i32) -> (i32, i32) {
    %c0_i32 = arith.constant 0 : i32
    %c0_i32_0 = arith.constant 0 : i32
    %c0_i32_1 = arith.constant 0 : i32
    return %c0_i32, %c0_i32_0 : i32, i32
  }
  func.func @transform_6(%arg0: i32) -> (i32, i32) {
    %c0_i32 = arith.constant 0 : i32
    %c0_i32_0 = arith.constant 0 : i32
    %c0_i32_1 = arith.constant 0 : i32
    return %c0_i32, %c0_i32_0 : i32, i32
  }
  func.func @transform_7(%arg0: i32) -> (i32, i32) {
    %c0_i32 = arith.constant 0 : i32
    %c0_i32_0 = arith.constant 0 : i32
    return %arg0, %c0_i32 : i32, i32
  }
}

</mosaic_0001>

<llo_original>
// kernel: tpu_custom_call.1
$region0: #{tpu_custom_call.1}
  #allocation0 [shape = 'u32[]', space=smem, size = 0x4, offset = 0x4, fixed_abs, tag = 'smem constant byte address 0x4 - core index']
  #allocation1 [shape = 'u32[144,128]{1,0:T(1,128)}', space=vmem, size = 0x12000, scoped, tag = 'internal scratch']
  %s0 = inlined_call_operand.hbm [shape: f32[16,32], index: 0, kind: input, shape index: {}]
  %s1 = inlined_call_operand.hbm [shape: bf16[32,64], index: 1, kind: input, shape index: {}]
  %s2 = inlined_call_operand.vmem [shape: f32[1,64], index: 2, kind: input, shape index: {}]
  %s3 = inlined_call_operand.vmem [shape: bf16[64,64], index: 3, kind: input, shape index: {}]
  %s4 = inlined_call_operand.vmem [shape: f32[1,64], index: 4, kind: input, shape index: {}]
  %s5 = inlined_call_operand.vmem [shape: bf16[64,16], index: 5, kind: input, shape index: {}]
  %s6 = inlined_call_operand.vmem [shape: f32[1,16], index: 6, kind: input, shape index: {}]
  %s7 = inlined_call_operand.hbm [shape: f32[16,16], index: 7, kind: output, shape index: {}]
  %s8 = sld [smem:[#allocation0]]
  $region69: #{tpu_custom_call.1} parent=0
    _
  %s10 = ssub.s32 1, %s8
  %s11 = scalar_select 0, %s10, %s8
  $region1: #{tpu_custom_call.1} parent=0
    #allocation2 [shape = 'u8[8192]{0}', space=vmem, size = 0x2000, scoped, tag = 'input window, operand 0']
    #allocation3 [shape = 's32[2]{0}', space=sflag, size = 0x8, scoped, tag = 'scoped memory for tpu_custom_call.1']
    #allocation4 [shape = 's32[2]{0}', space=sflag, size = 0x8, scoped, tag = 'scoped memory for tpu_custom_call.1']
    #allocation5 [shape = 'u8[8192]{0}', space=vmem, size = 0x2000, scoped, tag = 'input window, operand 1, single buffered']
    #allocation6 [shape = 's32[1]{0}', space=sflag, size = 0x4, scoped, tag = 'scoped memory for tpu_custom_call.1']
    #allocation7 [shape = 'u8[8192]{0}', space=vmem, size = 0x2000, scoped, tag = 'output window, operand 0']
    %12 = vsyncpa [#allocation3], 0
    %s13 = scalar_lea.sflag [#allocation3], 1
    %14 = vsyncpa %s13, 0
    %15 = vsyncpa [#allocation6], 0
    %16 = vsyncpa [#allocation4], 0
    %s17 = scalar_lea.sflag [#allocation4], 1
    %18 = vsyncpa %s17, 0
    loop: start=0, step=1, limit=4
    $region2: #{tpu_custom_call.1} parent=1 // loop_pre_header
      _
    $region3: #{tpu_custom_call.1} parent=1 // loop_header
      %s20 = sphi 0, %s24
      %p21 = scmp.ge.s32.totalorder %s20, 4
      %s30 = sphi 0, %s32
      %s33 = sphi 0, %s30
      %s34 = sphi 0, %s33
      %s50 = sphi 0, %s34
      %s54 = sphi 0, %s54
      %s56 = sphi 0, %s54
      %s57 = sphi 0, %s56
      %s71 = sphi 0, %s57
      %s75 = sphi 0, %s75
      %s77 = sphi 0, %s75
      %s78 = sphi 0, %s77
      %s92 = sphi 0, %s78
      %s96 = sphi 0, %s96
      %s98 = sphi 0, %s96
      %s99 = sphi 0, %s98
      %s113 = sphi 0, %s99
      %s117 = sphi 0, %s117
      %s119 = sphi 0, %s117
      %s120 = sphi 0, %s119
      %s134 = sphi 0, %s120
      %s138 = sphi 0, %s138
      %s140 = sphi 0, %s138
      %s141 = sphi 0, %s140
      %s155 = sphi 0, %s141
      %s159 = sphi 0, %s159
      %s161 = sphi 0, %s159
      %s162 = sphi 0, %s161
      %s176 = sphi 0, %s162
      %s182 = sphi 0, %s184
      %s185 = sphi 0, %s182
      %s186 = sphi 0, %s185
      %s202 = sphi 0, %s186
    $region4: #{tpu_custom_call.1} parent=1 // loop_header_branch
      %23 = sbr.rel (%p21) target = $region8
    $region5: #{tpu_custom_call.1} parent=1 // loop_body
      %s25 = ssub.s32 %s20, 1
      %s26 = ssub.s32 %s20, 2
      %s27 = sadd.s32 %s20, 1
      %s28 = ssub.s32 %s20, %s27
      %p29 = scmp.eq.s32.totalorder %s28, 0
      %s31 = sadd.s32 %s30, 1
      %s32 = scalar_select %p29, %s30, %s31
      %p35 = pneg %p29
      %p36 = scmp.eq.s32.totalorder %s20, 1
      %p37 = por %p35, %p36
      %p38 = scmp.ne.s32.totalorder %s30, %s33
      %p39 = scmp.eq.s32.totalorder %s20, 0
      %p40 = por %p38, %p39
      %p41 = scmp.ne.s32.totalorder %s30, %s33
      %p42 = scmp.eq.s32.totalorder %s25, 1
      %p43 = por %p41, %p42
      %p44 = scmp.ne.s32.totalorder %s33, %s34
      %p45 = scmp.eq.s32.totalorder %s25, 0
      %p46 = por %p44, %p45
      %p47 = scmp.ne.s32.totalorder %s33, %s34
      %p48 = scmp.eq.s32.totalorder %s26, 1
      %p49 = por %p47, %p48
      %p51 = scmp.ne.s32.totalorder %s34, %s50
      %p52 = scmp.eq.s32.totalorder %s26, 0
      %p53 = por %p51, %p52
      %s55 = sadd.s32 %s54, 1
      %p58 = scmp.eq.s32.totalorder %s20, 1
      %p59 = scmp.ne.s32.totalorder %s54, %s56
      %p60 = scmp.eq.s32.totalorder %s20, 0
      %p61 = por %p59, %p60
      %p62 = scmp.ne.s32.totalorder %s54, %s56
      %p63 = scmp.eq.s32.totalorder %s25, 1
      %p64 = por %p62, %p63
      %p65 = scmp.ne.s32.totalorder %s56, %s57
      %p66 = scmp.eq.s32.totalorder %s25, 0
      %p67 = por %p65, %p66
      %p68 = scmp.ne.s32.totalorder %s56, %s57
      %p69 = scmp.eq.s32.totalorder %s26, 1
      %p70 = por %p68, %p69
      %p72 = scmp.ne.s32.totalorder %s57, %s71
      %p73 = scmp.eq.s32.totalorder %s26, 0
      %p74 = por %p72, %p73
      %s76 = sadd.s32 %s75, 1
      %p79 = scmp.eq.s32.totalorder %s20, 1
      %p80 = scmp.ne.s32.totalorder %s75, %s77
      %p81 = scmp.eq.s32.totalorder %s20, 0
      %p82 = por %p80, %p81
      %p83 = scmp.ne.s32.totalorder %s75, %s77
      %p84 = scmp.eq.s32.totalorder %s25, 1
      %p85 = por %p83, %p84
      %p86 = scmp.ne.s32.totalorder %s77, %s78
      %p87 = scmp.eq.s32.totalorder %s25, 0
      %p88 = por %p86, %p87
      %p89 = scmp.ne.s32.totalorder %s77, %s78
      %p90 = scmp.eq.s32.totalorder %s26, 1
      %p91 = por %p89, %p90
      %p93 = scmp.ne.s32.totalorder %s78, %s92
      %p94 = scmp.eq.s32.totalorder %s26, 0
      %p95 = por %p93, %p94
      %s97 = sadd.s32 %s96, 1
      %p100 = scmp.eq.s32.totalorder %s20, 1
      %p101 = scmp.ne.s32.totalorder %s96, %s98
      %p102 = scmp.eq.s32.totalorder %s20, 0
      %p103 = por %p101, %p102
      %p104 = scmp.ne.s32.totalorder %s96, %s98
      %p105 = scmp.eq.s32.totalorder %s25, 1
      %p106 = por %p104, %p105
      %p107 = scmp.ne.s32.totalorder %s98, %s99
      %p108 = scmp.eq.s32.totalorder %s25, 0
      %p109 = por %p107, %p108
      %p110 = scmp.ne.s32.totalorder %s98, %s99
      %p111 = scmp.eq.s32.totalorder %s26, 1
      %p112 = por %p110, %p111
      %p114 = scmp.ne.s32.totalorder %s99, %s113
      %p115 = scmp.eq.s32.totalorder %s26, 0
      %p116 = por %p114, %p115
      %s118 = sadd.s32 %s117, 1
      %p121 = scmp.eq.s32.totalorder %s20, 1
      %p122 = scmp.ne.s32.totalorder %s117, %s119
      %p123 = scmp.eq.s32.totalorder %s20, 0
      %p124 = por %p122, %p123
      %p125 = scmp.ne.s32.totalorder %s117, %s119
      %p126 = scmp.eq.s32.totalorder %s25, 1
      %p127 = por %p125, %p126
      %p128 = scmp.ne.s32.totalorder %s119, %s120
      %p129 = scmp.eq.s32.totalorder %s25, 0
      %p130 = por %p128, %p129
      %p131 = scmp.ne.s32.totalorder %s119, %s120
      %p132 = scmp.eq.s32.totalorder %s26, 1
      %p133 = por %p131, %p132
      %p135 = scmp.ne.s32.totalorder %s120, %s134
      %p136 = scmp.eq.s32.totalorder %s26, 0
      %p137 = por %p135, %p136
      %s139 = sadd.s32 %s138, 1
      %p142 = scmp.eq.s32.totalorder %s20, 1
      %p143 = scmp.ne.s32.totalorder %s138, %s140
      %p144 = scmp.eq.s32.totalorder %s20, 0
      %p145 = por %p143, %p144
      %p146 = scmp.ne.s32.totalorder %s138, %s140
      %p147 = scmp.eq.s32.totalorder %s25, 1
      %p148 = por %p146, %p147
      %p149 = scmp.ne.s32.totalorder %s140, %s141
      %p150 = scmp.eq.s32.totalorder %s25, 0
      %p151 = por %p149, %p150
      %p152 = scmp.ne.s32.totalorder %s140, %s141
      %p153 = scmp.eq.s32.totalorder %s26, 1
      %p154 = por %p152, %p153
      %p156 = scmp.ne.s32.totalorder %s141, %s155
      %p157 = scmp.eq.s32.totalorder %s26, 0
      %p158 = por %p156, %p157
      %s160 = sadd.s32 %s159, 1
      %p163 = scmp.eq.s32.totalorder %s20, 1
      %p164 = scmp.ne.s32.totalorder %s159, %s161
      %p165 = scmp.eq.s32.totalorder %s20, 0
      %p166 = por %p164, %p165
      %p167 = scmp.ne.s32.totalorder %s159, %s161
      %p168 = scmp.eq.s32.totalorder %s25, 1
      %p169 = por %p167, %p168
      %p170 = scmp.ne.s32.totalorder %s161, %s162
      %p171 = scmp.eq.s32.totalorder %s25, 0
      %p172 = por %p170, %p171
      %p173 = scmp.ne.s32.totalorder %s161, %s162
      %p174 = scmp.eq.s32.totalorder %s26, 1
      %p175 = por %p173, %p174
      %p177 = scmp.ne.s32.totalorder %s162, %s176
      %p178 = scmp.eq.s32.totalorder %s26, 0
      %p179 = por %p177, %p178
      %s180 = ssub.s32 %s20, %s27
      %p181 = scmp.eq.s32.totalorder %s180, 0
      %s183 = sadd.s32 %s182, 1
      %s184 = scalar_select %p181, %s182, %s183
      %p187 = pneg %p181
      %p188 = scmp.eq.s32.totalorder %s20, 1
      %p189 = por %p187, %p188
      %p190 = scmp.ne.s32.totalorder %s182, %s185
      %p191 = scmp.eq.s32.totalorder %s20, 0
      %p192 = por %p190, %p191
      %p193 = scmp.ne.s32.totalorder %s182, %s185
      %p194 = scmp.eq.s32.totalorder %s25, 1
      %p195 = por %p193, %p194
      %p196 = scmp.ne.s32.totalorder %s185, %s186
      %p197 = scmp.eq.s32.totalorder %s25, 0
      %p198 = por %p196, %p197
      %p199 = scmp.ne.s32.totalorder %s185, %s186
      %p200 = scmp.eq.s32.totalorder %s26, 1
      %p201 = por %p199, %p200
      %p203 = scmp.ne.s32.totalorder %s186, %s202
      %p204 = scmp.eq.s32.totalorder %s26, 0
      %p205 = por %p203, %p204
      %p206 = scmp.le.s32.totalorder 1, %s20
      %p207 = scmp.lt.s32.totalorder %s20, 3
      %p208 = pnand %p206, %p207
      %p209 = pneg %p208
      // Predicated region
      $region9: #{tpu_custom_call.1} parent=5 // pred_check
        _
      $region10: #{tpu_custom_call.1} parent=5 // pred_check_branch
        %211 = sbr.rel (%p208) target = $region12
      $region11: #{tpu_custom_call.1} parent=5 // pred_region
        %s212 = ssub.s32 %s20, 1
        // Predicated region
        $region13: #{tpu_custom_call.1} parent=11 // pred_check
          %p213 = pneg %p67
        $region14: #{tpu_custom_call.1} parent=11 // pred_check_branch
          %215 = sbr.rel (%p213) target = $region16
        $region15: #{tpu_custom_call.1} parent=11 // pred_region
          %s217 = ssub.s32 256, 256
          %218 = vsyncadd [#allocation6], %s217
          %s219 = sshll.u32 [#allocation5], 4
          %s220 = int_to_ptr.vmem [resolvable:$true] %s219
          %225 = dma.hbm_to_vmem [thread:$0]  %s1, 256, %s220, [#allocation6], 64, 64, 4
        $region16: #{tpu_custom_call.1} parent=11 // pred_fallthru
          _
        // Predicated region
        $region17: #{tpu_custom_call.1} parent=11 // pred_check
          %p226 = pneg %p88
        $region18: #{tpu_custom_call.1} parent=11 // pred_check_branch
          %228 = sbr.rel (%p226) target = $region20
        $region19: #{tpu_custom_call.1} parent=11 // pred_region
          _
        $region20: #{tpu_custom_call.1} parent=11 // pred_fallthru
          _
        // Predicated region
        $region21: #{tpu_custom_call.1} parent=11 // pred_check
          %p229 = pneg %p109
        $region22: #{tpu_custom_call.1} parent=11 // pred_check_branch
          %231 = sbr.rel (%p229) target = $region24
        $region23: #{tpu_custom_call.1} parent=11 // pred_region
          _
        $region24: #{tpu_custom_call.1} parent=11 // pred_fallthru
          _
        // Predicated region
        $region25: #{tpu_custom_call.1} parent=11 // pred_check
          %p232 = pneg %p130
        $region26: #{tpu_custom_call.1} parent=11 // pred_check_branch
          %234 = sbr.rel (%p232) target = $region28
        $region27: #{tpu_custom_call.1} parent=11 // pred_region
          _
        $region28: #{tpu_custom_call.1} parent=11 // pred_fallthru
          _
        // Predicated region
        $region29: #{tpu_custom_call.1} parent=11 // pred_check
          %p235 = pneg %p151
        $region30: #{tpu_custom_call.1} parent=11 // pred_check_branch
          %237 = sbr.rel (%p235) target = $region32
        $region31: #{tpu_custom_call.1} parent=11 // pred_region
          _
        $region32: #{tpu_custom_call.1} parent=11 // pred_fallthru
          _
        // Predicated region
        $region33: #{tpu_custom_call.1} parent=11 // pred_check
          %p238 = pneg %p172
        $region34: #{tpu_custom_call.1} parent=11 // pred_check_branch
          %240 = sbr.rel (%p238) target = $region36
        $region35: #{tpu_custom_call.1} parent=11 // pred_region
          _
        $region36: #{tpu_custom_call.1} parent=11 // pred_fallthru
          _
      $region12: #{tpu_custom_call.1} parent=5 // pred_fallthru
        _
      %p241 = scmp.lt.s32.totalorder %s20, 2
      // Predicated region
      $region37: #{tpu_custom_call.1} parent=5 // pred_check
        %p242 = pneg %p241
      $region38: #{tpu_custom_call.1} parent=5 // pred_check_branch
        %244 = sbr.rel (%p242) target = $region40
      $region39: #{tpu_custom_call.1} parent=5 // pred_region
        // Predicated region
        $region41: #{tpu_custom_call.1} parent=39 // pred_check
          %p245 = pneg %p40
        $region42: #{tpu_custom_call.1} parent=39 // pred_check_branch
          %247 = sbr.rel (%p245) target = $region44
        $region43: #{tpu_custom_call.1} parent=39 // pred_region
          %s248 = sand.u32 %s30, 1
          %s249 = scalar_lea.sflag [#allocation3], %s248
          %s250 = sand.u32 %s30, 1
          %s251 = smul.addr %s250, 8
          %s252 = scalar_lea.vmem [#allocation2], %s251
          %s254 = ssub.s32 128, 128
          %255 = vsyncadd %s249, %s254
          %s256 = smul.addr %s20, 128
          %s257 = scalar_lea.hbm %s0, %s256
          %s259 = sshll.u32 %s252, 4
          %s260 = int_to_ptr.vmem [resolvable:$true] %s259
          %262 = dma.hbm_to_vmem [thread:$0]  %s257, 128, %s260, %s249
        $region44: #{tpu_custom_call.1} parent=39 // pred_fallthru
          _
      $region40: #{tpu_custom_call.1} parent=5 // pred_fallthru
        _
      %p263 = scmp.le.s32.totalorder 1, %s20
      %p264 = scmp.lt.s32.totalorder %s20, 3
      %p265 = pnand %p263, %p264
      %p266 = pneg %p265
      // Predicated region
      $region45: #{tpu_custom_call.1} parent=5 // pred_check
        _
      $region46: #{tpu_custom_call.1} parent=5 // pred_check_branch
        %268 = sbr.rel (%p265) target = $region48
      $region47: #{tpu_custom_call.1} parent=5 // pred_region
        %s269 = ssub.s32 %s20, 1
        %s270 = sand.u32 %s33, 1
        %s271 = scalar_lea.sflag [#allocation3], %s270
        %s272 = sand.u32 %s33, 1
        %s273 = smul.addr %s272, 8
        %s274 = scalar_lea.vmem [#allocation2], %s273
        // Predicated region
        $region49: #{tpu_custom_call.1} parent=47 // pred_check
          %p275 = pneg %p46
        $region50: #{tpu_custom_call.1} parent=47 // pred_check_branch
          %277 = sbr.rel (%p275) target = $region52
        $region51: #{tpu_custom_call.1} parent=47 // pred_region
          %278 = dma.done %s271, 128
        $region52: #{tpu_custom_call.1} parent=47 // pred_fallthru
          _
        // Predicated region
        $region53: #{tpu_custom_call.1} parent=47 // pred_check
          %p279 = pneg %p67
        $region54: #{tpu_custom_call.1} parent=47 // pred_check_branch
          %281 = sbr.rel (%p279) target = $region56
        $region55: #{tpu_custom_call.1} parent=47 // pred_region
          %282 = dma.done [#allocation6], 256
        $region56: #{tpu_custom_call.1} parent=47 // pred_fallthru
          _
        %s283 = sand.u32 %s33, 1
        %s284 = scalar_lea.sflag [#allocation3], %s283
        %s285 = sand.u32 %s33, 1
        %s286 = smul.addr %s285, 8
        %s287 = scalar_lea.vmem [#allocation2], %s286
        %p288 = pneg %p46
        %p289 = pneg %p43
        %p290 = pneg %p67
        %p291 = pneg %p64
        %p292 = pneg %p88
        %p293 = pneg %p85
        %p294 = pneg %p109
        %p295 = pneg %p106
        %p296 = pneg %p130
        %p297 = pneg %p127
        %p298 = pneg %p151
        %p299 = pneg %p148
        %p300 = pneg %p172
        %p301 = pneg %p169
        %p302 = pneg %p198
        %p303 = pneg %p195
        %s304 = sand.u32 %s185, 1
        %s305 = scalar_lea.sflag [#allocation4], %s304
        %s306 = sand.u32 %s185, 1
        %s307 = smul.addr %s306, 8
        %s308 = scalar_lea.vmem [#allocation7], %s307
        %v310 = vld [vmem:[%s274] sm:$0xff]
        %v311 = vpack.c.bf16 %v310, %v310
        %v312 = vld [vmem:[#allocation5] sm:$0xf]
        %v313 = vld [vmem:[#allocation5 + $0x4] sm:$0xf]
        %v314 = vld [vmem:[#allocation5 + $0x8] sm:$0xf]
        %v315 = vld [vmem:[#allocation5 + $0xc] sm:$0xf]
        %v316 = vld [vmem:[%s2] sm:$0x1]
        %v318 = vlaneseq
        %v319 = vshrl.u32 %v318, 7
        %v320 = vsub.s32 0, %v319
        %v321 = vrot.slane %v316, %v320
        %v327 = vunpack.c.l.b16 %v312
        %v328 = vunpack.c.l.b16 %v313
        %v329 = vunpack.c.l.b16 %v314
        %v330 = vunpack.c.l.b16 %v315
        %v331 = vpack.c.b16 %v328, %v327
        %v332 = vpack.c.b16 %v330, %v329
        %vm335 = vcmask 261120
        %v337 = vsel %vm335, %v311, 0
        %339 = vmatprep.subr.bf16.mxu0 0
        %340 = vmatpush1.bf16.msra.mxu0 0
        %341 = vmatprep.subr.bf16.mxu0 0
        %342 = vmatpush1.bf16.msra.mxu0 0
        %343 = vmatprep.subr.bf16.mxu0 0
        %344 = vmatpush1.bf16.msra.mxu0 0
        %345 = vmatprep.subr.bf16.mxu0 0
        %346 = vmatpush1.bf16.msra.mxu0 0
        %347 = vmatprep.subr.bf16.mxu0 0
        %348 = vmatpush1.bf16.msra.mxu0 0
        %349 = vmatprep.subr.bf16.mxu0 0
        %350 = vmatpush1.bf16.msra.mxu0 0
        %351 = vmatprep.subr.bf16.mxu0 0
        %352 = vmatpush1.bf16.msra.mxu0 %v332
        %353 = vmatprep.subr.bf16.mxu0 0
        %354 = vmatpush1.bf16.msra.mxu0 %v331
        %355 = vmatprep.subr.bf16.mxu0 0
        %356 = vmatpush2.bf16.msra.mxu0 0
        %357 = vmatprep.subr.bf16.mxu0 0
        %358 = vmatpush2.bf16.msra.mxu0 0
        %359 = vmatprep.subr.bf16.mxu0 0
        %360 = vmatpush2.bf16.msra.mxu0 0
        %361 = vmatprep.subr.bf16.mxu0 0
        %362 = vmatpush2.bf16.msra.mxu0 0
        %363 = vmatprep.subr.bf16.mxu0 0
        %364 = vmatpush2.bf16.msra.mxu0 0
        %365 = vmatprep.subr.bf16.mxu0 0
        %366 = vmatpush2.bf16.msra.mxu0 0
        %367 = vmatprep.subr.bf16.mxu0 0
        %368 = vmatpush2.bf16.msra.mxu0 0
        %369 = vmatprep.subr.bf16.mxu0 0
        %370 = vmatpush2.bf16.msra.mxu0 0
        %371 = vmatprep.mubr.bf16.mxu0 0
        %372 = vmatmul.mubr.bf16.gmra.mxu0 %v337
        %v373 = vpop.f32.mrf.mxu0
        %v374 = vadd.f32 %v321, %v373
        %v375 = vpop.f32.mrf.mxu0
        %v376 = vpop.f32.mrf.mxu0
        %v377 = vpop.f32.mrf.mxu0
        %378 = vdwg.mxu0
        %v379 = vmax.f32 %v374, 0.0
        %v380 = vpack.c.bf16 %v379, %v379
        %v381 = vld [vmem:[%s3] sm:$0xf]
        %v382 = vld [vmem:[%s3 + $0x4] sm:$0xf]
        %v383 = vld [vmem:[%s3 + $0x8] sm:$0xf]
        %v384 = vld [vmem:[%s3 + $0xc] sm:$0xf]
        %v385 = vld [vmem:[%s3 + $0x10] sm:$0xf]
        %v386 = vld [vmem:[%s3 + $0x14] sm:$0xf]
        %v387 = vld [vmem:[%s3 + $0x18] sm:$0xf]
        %v388 = vld [vmem:[%s3 + $0x1c] sm:$0xf]
        %v389 = vld [vmem:[%s4] sm:$0x1]
        %v391 = vlaneseq
        %v392 = vshrl.u32 %v391, 7
        %v393 = vsub.s32 0, %v392
        %v394 = vrot.slane %v389, %v393
        %v404 = vunpack.c.l.b16 %v381
        %v405 = vunpack.c.l.b16 %v382
        %v406 = vunpack.c.l.b16 %v383
        %v407 = vunpack.c.l.b16 %v384
        %v408 = vunpack.c.l.b16 %v385
        %v409 = vunpack.c.l.b16 %v386
        %v410 = vunpack.c.l.b16 %v387
        %v411 = vunpack.c.l.b16 %v388
        %v412 = vpack.c.b16 %v405, %v404
        %v413 = vpack.c.b16 %v407, %v406
        %v414 = vpack.c.b16 %v409, %v408
        %v415 = vpack.c.b16 %v411, %v410
        %vm420 = vcmask 523264
        %v422 = vsel %vm420, %v380, 0
        %424 = vmatprep.subr.bf16.mxu0 0
        %425 = vmatpush1.bf16.msra.mxu0 0
        %426 = vmatprep.subr.bf16.mxu0 0
        %427 = vmatpush1.bf16.msra.mxu0 0
        %428 = vmatprep.subr.bf16.mxu0 0
        %429 = vmatpush1.bf16.msra.mxu0 0
        %430 = vmatprep.subr.bf16.mxu0 0
        %431 = vmatpush1.bf16.msra.mxu0 0
        %432 = vmatprep.subr.bf16.mxu0 0
        %433 = vmatpush1.bf16.msra.mxu0 %v415
        %434 = vmatprep.subr.bf16.mxu0 0
        %435 = vmatpush1.bf16.msra.mxu0 %v414
        %436 = vmatprep.subr.bf16.mxu0 0
        %437 = vmatpush1.bf16.msra.mxu0 %v413
        %438 = vmatprep.subr.bf16.mxu0 0
        %439 = vmatpush1.bf16.msra.mxu0 %v412
        %440 = vmatprep.subr.bf16.mxu0 0
        %441 = vmatpush2.bf16.msra.mxu0 0
        %442 = vmatprep.subr.bf16.mxu0 0
        %443 = vmatpush2.bf16.msra.mxu0 0
        %444 = vmatprep.subr.bf16.mxu0 0
        %445 = vmatpush2.bf16.msra.mxu0 0
        %446 = vmatprep.subr.bf16.mxu0 0
        %447 = vmatpush2.bf16.msra.mxu0 0
        %448 = vmatprep.subr.bf16.mxu0 0
        %449 = vmatpush2.bf16.msra.mxu0 0
        %450 = vmatprep.subr.bf16.mxu0 0
        %451 = vmatpush2.bf16.msra.mxu0 0
        %452 = vmatprep.subr.bf16.mxu0 0
        %453 = vmatpush2.bf16.msra.mxu0 0
        %454 = vmatprep.subr.bf16.mxu0 0
        %455 = vmatpush2.bf16.msra.mxu0 0
        %456 = vmatprep.mubr.bf16.mxu0 0
        %457 = vmatmul.mubr.bf16.gmra.mxu0 %v422
        %v458 = vpop.f32.mrf.mxu0
        %v459 = vadd.f32 %v394, %v458
        %v460 = vpop.f32.mrf.mxu0
        %v461 = vpop.f32.mrf.mxu0
        %v462 = vpop.f32.mrf.mxu0
        %463 = vdwg.mxu0
        %v464 = vmax.f32 %v459, 0.0
        %v465 = vpack.c.bf16 %v464, %v464
        %v466 = vld [vmem:[%s5] sm:$0xf]
        %v467 = vld [vmem:[%s5 + $0x4] sm:$0xf]
        %v468 = vld [vmem:[%s5 + $0x8] sm:$0xf]
        %v469 = vld [vmem:[%s5 + $0xc] sm:$0xf]
        %v470 = vld [vmem:[%s5 + $0x10] sm:$0xf]
        %v471 = vld [vmem:[%s5 + $0x14] sm:$0xf]
        %v472 = vld [vmem:[%s5 + $0x18] sm:$0xf]
        %v473 = vld [vmem:[%s5 + $0x1c] sm:$0xf]
        %v474 = vld [vmem:[%s6] sm:$0x1]
        %v476 = vlaneseq
        %v477 = vshrl.u32 %v476, 7
        %v478 = vsub.s32 0, %v477
        %v479 = vrot.slane %v474, %v478
        %v489 = vunpack.c.l.b16 %v466
        %v490 = vunpack.c.l.b16 %v467
        %v491 = vunpack.c.l.b16 %v468
        %v492 = vunpack.c.l.b16 %v469
        %v493 = vunpack.c.l.b16 %v470
        %v494 = vunpack.c.l.b16 %v471
        %v495 = vunpack.c.l.b16 %v472
        %v496 = vunpack.c.l.b16 %v473
        %v497 = vpack.c.b16 %v490, %v489
        %v498 = vpack.c.b16 %v492, %v491
        %v499 = vpack.c.b16 %v494, %v493
        %v500 = vpack.c.b16 %v496, %v495
        %v506 = vsel %vm420, %v465, 0
        %508 = vmatprep.subr.bf16.mxu0 0
        %509 = vmatpush1.bf16.msra.mxu0 0
        %510 = vmatprep.subr.bf16.mxu0 0
        %511 = vmatpush1.bf16.msra.mxu0 0
        %512 = vmatprep.subr.bf16.mxu0 0
        %513 = vmatpush1.bf16.msra.mxu0 0
        %514 = vmatprep.subr.bf16.mxu0 0
        %515 = vmatpush1.bf16.msra.mxu0 0
        %516 = vmatprep.subr.bf16.mxu0 0
        %517 = vmatpush1.bf16.msra.mxu0 %v500
        %518 = vmatprep.subr.bf16.mxu0 0
        %519 = vmatpush1.bf16.msra.mxu0 %v499
        %520 = vmatprep.subr.bf16.mxu0 0
        %521 = vmatpush1.bf16.msra.mxu0 %v498
        %522 = vmatprep.subr.bf16.mxu0 0
        %523 = vmatpush1.bf16.msra.mxu0 %v497
        %524 = vmatprep.subr.bf16.mxu0 0
        %525 = vmatpush2.bf16.msra.mxu0 0
        %526 = vmatprep.subr.bf16.mxu0 0
        %527 = vmatpush2.bf16.msra.mxu0 0
        %528 = vmatprep.subr.bf16.mxu0 0
        %529 = vmatpush2.bf16.msra.mxu0 0
        %530 = vmatprep.subr.bf16.mxu0 0
        %531 = vmatpush2.bf16.msra.mxu0 0
        %532 = vmatprep.subr.bf16.mxu0 0
        %533 = vmatpush2.bf16.msra.mxu0 0
        %534 = vmatprep.subr.bf16.mxu0 0
        %535 = vmatpush2.bf16.msra.mxu0 0
        %536 = vmatprep.subr.bf16.mxu0 0
        %537 = vmatpush2.bf16.msra.mxu0 0
        %538 = vmatprep.subr.bf16.mxu0 0
        %539 = vmatpush2.bf16.msra.mxu0 0
        %540 = vmatprep.mubr.bf16.mxu0 0
        %541 = vmatmul.mubr.bf16.gmra.mxu0 %v506
        %v542 = vpop.f32.mrf.mxu0
        %v543 = vadd.f32 %v479, %v542
        %v544 = vpop.f32.mrf.mxu0
        %v545 = vpop.f32.mrf.mxu0
        %v546 = vpop.f32.mrf.mxu0
        %547 = vdwg.mxu0
        %vm548 = vcmask 130048
        %549 = vst.msk [vmem:[%s308] sm:$0xff] %vm548, %v543
        %s550 = sand.u32 %s185, 1
        %s551 = scalar_lea.sflag [#allocation4], %s550
        %s552 = sand.u32 %s185, 1
        %s553 = smul.addr %s552, 8
        %s554 = scalar_lea.vmem [#allocation7], %s553
        // Predicated region
        $region57: #{tpu_custom_call.1} parent=47 // pred_check
          %p555 = pneg %p195
        $region58: #{tpu_custom_call.1} parent=47 // pred_check_branch
          %557 = sbr.rel (%p555) target = $region60
        $region59: #{tpu_custom_call.1} parent=47 // pred_region
          %s559 = ssub.s32 128, 128
          %560 = vsyncadd %s551, %s559
          %s561 = smul.addr %s25, 128
          %s562 = scalar_lea.hbm %s7, %s561
          %s564 = sshll.u32 %s554, 4
          %s565 = int_to_ptr.vmem [resolvable:$true] %s564
          %567 = dma.vmem_to_hbm [thread:$0]  %s565, 128, %s562, %s551
        $region60: #{tpu_custom_call.1} parent=47 // pred_fallthru
          _
      $region48: #{tpu_custom_call.1} parent=5 // pred_fallthru
        _
      %p568 = scmp.le.s32.totalorder 2, %s20
      // Predicated region
      $region61: #{tpu_custom_call.1} parent=5 // pred_check
        %p569 = pneg %p568
      $region62: #{tpu_custom_call.1} parent=5 // pred_check_branch
        %571 = sbr.rel (%p569) target = $region64
      $region63: #{tpu_custom_call.1} parent=5 // pred_region
        %s572 = ssub.s32 %s20, 2
        // Predicated region
        $region65: #{tpu_custom_call.1} parent=63 // pred_check
          %p573 = pneg %p201
        $region66: #{tpu_custom_call.1} parent=63 // pred_check_branch
          %575 = sbr.rel (%p573) target = $region68
        $region67: #{tpu_custom_call.1} parent=63 // pred_region
          %s576 = sand.u32 %s186, 1
          %s577 = scalar_lea.sflag [#allocation4], %s576
          %s578 = sand.u32 %s186, 1
          %s579 = smul.addr %s578, 8
          %s580 = scalar_lea.vmem [#allocation7], %s579
          %581 = dma.done %s577, 128
        $region68: #{tpu_custom_call.1} parent=63 // pred_fallthru
          _
      $region64: #{tpu_custom_call.1} parent=5 // pred_fallthru
        _
    $region6: #{tpu_custom_call.1} parent=1 // loop_footer
      %s24 = sadd.s32 1, %s20
    $region7: #{tpu_custom_call.1} parent=1 // loop_footer_branch
      %19 = sbr.rel target = $region3
    $region8: #{tpu_custom_call.1} parent=1 // loop_exit
      _
    %582 = vsyncpa [#allocation3], 1
    %s583 = scalar_lea.sflag [#allocation3], 1
    %584 = vsyncpa %s583, 1
    %585 = vsyncpa [#allocation6], 1
    %586 = vsyncpa [#allocation4], 1
    %s587 = scalar_lea.sflag [#allocation4], 1
    %588 = vsyncpa %s587, 1

</llo_original>
